<compile_context>
chip_gen: v7x
topology: tpu7x:2x2x1
jax: 0.10.0
libtpu: 0.0.40
codegen_flags: <defaults>
</compile_context>

<pallas_src>
import functools

import jax
import jax.numpy as jnp
from jax.experimental import pallas as pl
from jax.experimental.pallas import tpu as pltpu

IGNORE_INDEX = 255
# The reference pulls "object"-category trainIds from a global Cityscapes
# LABELS table: pole=5, traffic light=6, traffic sign=7.
# TODO(synk): LABELS table itself is external; trainIds are hard-coded.
OBJECT_CLASSES = (5, 6, 7)


def _ce_dice_kernel(x_ref, t_ref, out_ref, *, hw, tile, num_classes):
    """Accumulate per image n into out[n, :, :] (shape (C, 3)):

        out[:, 0] = per-class pixel counts  (#pixels with target == c)
        out[:, 1] = per-class logit sums    (sum of class-c logit where target == c)
        out[0, 2] = sum over valid pixels of log-sum-exp(logits)

    Everything else (CE mean, Dice per object class) is derived in the wrapper.
    """
    C = num_classes
    j = pl.program_id(1)  # pixel-tile (reduction) axis

    @pl.when(j == 0)
    def _init():
        out_ref[...] = jnp.zeros_like(out_ref)

    x_raw = x_ref[0]                              # (C, T) native dtype
    xf = x_raw.astype(jnp.float32)                # (C, T) f32 softmax path
    t = t_ref[0].astype(jnp.int32)                # (1, T) labels

    # Pixel-index bound for the ragged tail: no wrapper-side padding, so the
    # last block may over-read garbage lanes. Validity comes from this bound,
    # never from the over-read data itself.
    pix = j * tile + jax.lax.broadcasted_iota(jnp.int32, (1, tile), 1)
    in_bounds = pix < hw                          # (1, T)

    valid = (t != IGNORE_INDEX) & in_bounds       # (1, T)

    # log-sum-exp over the class (sublane) axis.
    m = jnp.max(xf, axis=0, keepdims=True)                    # (1, T)
    e = jnp.exp(xf - m)
    lse = jnp.log(jnp.sum(e, axis=0, keepdims=True)) + m      # (1, T)

    # One-hot via broadcast compare against a (C,1) class column (no (C,T) iota).
    class_col = jax.lax.broadcasted_iota(jnp.int32, (C, 1), 0)  # (C, 1)
    onehot = (t == class_col) & in_bounds                       # (C, T)

    # Pick chain in the native logit dtype (bf16 select on v6e/v7x); reduce
    # (accumulate) in f32 for precision.
    onehot_x = jnp.where(onehot, x_raw, 0.0)                    # (C, T)

    counts = jnp.sum(onehot.astype(jnp.float32), axis=1, keepdims=True)    # (C, 1)
    sums = jnp.sum(onehot_x.astype(jnp.float32), axis=1, keepdims=True)    # (C, 1)
    lse_valid = jnp.sum(jnp.where(valid, lse, 0.0), axis=1, keepdims=True)  # (1, 1)

    # Pack [counts | sums | lse_valid-in-row-0] into a (C, 3) partial and
    # accumulate into the resident per-image output slab.
    lane3 = jax.lax.broadcasted_iota(jnp.int32, (C, 3), 1)
    row3 = jax.lax.broadcasted_iota(jnp.int32, (C, 3), 0)
    partial = (jnp.where(lane3 == 0, counts, 0.0)
               + jnp.where(lane3 == 1, sums, 0.0)
               + jnp.where((lane3 == 2) & (row3 == 0), lse_valid, 0.0))

    out_ref[...] += partial.reshape(1, C, 3)


@functools.partial(jax.jit, static_argnames=("tile_hw",))
def ce_dice_loss(logits_nchw, target_nhw, *, tile_hw=32768):
    N, C, H, W = logits_nchw.shape
    HW = H * W
    K = len(OBJECT_CLASSES)

    # Metadata-only views of contiguous NCHW inputs; labels streamed in their
    # native dtype and widened in-kernel.
    x = logits_nchw.reshape(N, C, HW)
    t = target_nhw.reshape(N, 1, HW)

    # Lane-aligned pixel tile, never larger than the pixel axis (ragged tail
    # handled by the in-kernel index bound, no jnp.pad of the logits).
    tile = min(int(tile_hw), max(128, (HW // 128) * 128))
    num_tiles = pl.cdiv(HW, tile)

    kernel = functools.partial(
        _ce_dice_kernel, hw=HW, tile=tile, num_classes=C)

    stats = pl.pallas_call(
        kernel,
        out_shape=jax.ShapeDtypeStruct((N, C, 3), jnp.float32),
        grid_spec=pltpu.PrefetchScalarGridSpec(
            num_scalar_prefetch=0,
            grid=(N, num_tiles),
            in_specs=[
                pl.BlockSpec((1, C, tile), lambda n, j: (n, 0, j)),
                pl.BlockSpec((1, 1, tile), lambda n, j: (n, 0, j)),
            ],
            out_specs=pl.BlockSpec((1, C, 3), lambda n, j: (n, 0, 0)),
        ),
        compiler_params=pltpu.CompilerParams(
            dimension_semantics=("parallel", "arbitrary"),
            vmem_limit_bytes=48 * 1024 * 1024),
    )(x, t)

    # Per-image partials -> global totals.
    counts = jnp.sum(stats[:, :, 0], axis=0)       # (C,)  pixels with target == c
    sums = jnp.sum(stats[:, :, 1], axis=0)         # (C,)  class-c logit sum on those pixels
    lse_valid_sum = jnp.sum(stats[:, 0, 2])        # sum of LSE over valid pixels

    # CrossEntropy (weight=None): mean over non-ignored pixels of (lse - x_target).
    # sum_valid(x_target) grouped by target class is exactly sum_c sums[c].
    ce_cnt = jnp.sum(counts)
    ce_sum = lse_valid_sum - jnp.sum(sums)
    ce_loss = ce_sum / ce_cnt   # NaN if every pixel is ignored (matches PyTorch)

    # Dice on raw logits for the "object" classes (faithful to the reference).
    smooth = 1.0
    dice_loss = 0.0
    for c in OBJECT_CLASSES:
        s = sums[c]
        n = counts[c]
        dice_loss = dice_loss + (1.0 - (2.0 * s + smooth) / (s + n + smooth))
    mean_dice = dice_loss / K if K > 0 else 0.0

    return ce_loss + mean_dice


def _ref_ce_dice(logits, target):
    """Pure-JAX reference of the PyTorch CE_Dice_Loss forward."""
    x = logits.astype(jnp.float32)
    logp = jax.nn.log_softmax(x, axis=1)
    t = target.astype(jnp.int32)
    valid = t != IGNORE_INDEX
    t_safe = jnp.where(valid, t, 0)
    picked = jnp.take_along_axis(logp, t_safe[:, None, :, :], axis=1)[:, 0]
    ce = -jnp.sum(jnp.where(valid, picked, 0.0)) / jnp.sum(valid)
    smooth = 1.0
    dice = 0.0
    for c in OBJECT_CLASSES:
        m = t == c
        s = jnp.sum(jnp.where(m, x[:, c, :, :], 0.0))
        n = jnp.sum(m.astype(jnp.float32))
        dice = dice + 1.0 - (2.0 * s + smooth) / (s + n + smooth)
    return ce + dice / len(OBJECT_CLASSES)


if __name__ == "__main__":
    key = jax.random.PRNGKey(0)
    kx, kt, km, kx2, kt2 = jax.random.split(key, 5)

    # Case 1: lane-aligned spatial size, with ignore pixels.
    N, C, H, W = 2, 8, 16, 16
    logits = jax.random.normal(kx, (N, C, H, W), dtype=jnp.float32)
    target = jax.random.randint(kt, (N, H, W), 0, C).astype(jnp.int32)
    ign = jax.random.bernoulli(km, 0.1, (N, H, W))
    target = jnp.where(ign, jnp.int32(IGNORE_INDEX), target)

    loss = ce_dice_loss(logits, target)
    jax.block_until_ready(loss)
    ref = _ref_ce_dice(logits, target)
    assert bool(jnp.isfinite(loss)), "non-finite loss"
    assert float(jnp.abs(loss - ref)) < 1e-4, (float(loss), float(ref))

    # Case 2: H*W not a multiple of 128 -> exercises the in-kernel pixel-index
    # bound (ragged tail, no wrapper padding).
    N2, H2, W2 = 1, 9, 15
    logits2 = jax.random.normal(kx2, (N2, C, H2, W2), dtype=jnp.float32)
    target2 = jax.random.randint(kt2, (N2, H2, W2), 0, C).astype(jnp.int32)

    loss2 = ce_dice_loss(logits2, target2)
    jax.block_until_ready(loss2)
    ref2 = _ref_ce_dice(logits2, target2)
    assert bool(jnp.isfinite(loss2)), "non-finite loss (ragged case)"
    assert float(jnp.abs(loss2 - ref2)) < 1e-4, (float(loss2), float(ref2))

    print("KERNEL_OK")
</pallas_src>

<mosaic_0001>
module attributes {stable_mosaic.version = 11 : i64} {
  func.func @_ce_dice_kernel(%arg0: i32, %arg1: i32, %arg2: memref<1x8x256xf32, #tpu.memory_space<vmem>>, %arg3: memref<1x1x256xi32, #tpu.memory_space<vmem>>, %arg4: memref<1x8x3xf32, #tpu.memory_space<vmem>>) attributes {dimension_semantics = [#tpu.dimension_semantics<parallel>, #tpu.dimension_semantics<arbitrary>], iteration_bounds = array<i64: 2, 1>, scalar_prefetch = 0 : i64, scratch_operands = 0 : i64, tpu.core_type = #tpu.core_type<tc>, window_params = [{transform_indices = @transform_0, window_bounds = array<i64: 1, 8, 256>}, {transform_indices = @transform_1, window_bounds = array<i64: 1, 1, 256>}, {transform_indices = @transform_2, window_bounds = array<i64: 1, 8, 3>}]} {
    %c0_i32 = arith.constant 0 : i32
    %0 = arith.cmpi eq, %arg1, %c0_i32 : i32
    %1 = arith.extui %0 : i1 to i32
    %c0_i32_0 = arith.constant 0 : i32
    %2 = arith.cmpi ne, %1, %c0_i32_0 : i32
    scf.if %2 {
      %cst_24 = arith.constant 0.000000e+00 : f32
      %72 = vector.broadcast %cst_24 : f32 to vector<1x8x3xf32>
      %c0_25 = arith.constant 0 : index
      %c0_26 = arith.constant 0 : index
      %c0_27 = arith.constant 0 : index
      %73 = vector.load %arg4[%c0_25, %c0_26, %c0_27] : memref<1x8x3xf32, #tpu.memory_space<vmem>>, vector<1x8x3xf32>
      tpu.vector_store %arg4[%c0_25, %c0_26, %c0_27], %72 {strides = array<i32>} : memref<1x8x3xf32, #tpu.memory_space<vmem>>, vector<1x8x3xf32>,
    } else {
    }
    %c0 = arith.constant 0 : index
    %c0_1 = arith.constant 0 : index
    %c0_2 = arith.constant 0 : index
    %3 = vector.load %arg2[%c0, %c0_1, %c0_2] : memref<1x8x256xf32, #tpu.memory_space<vmem>>, vector<1x8x256xf32>
    %4 = vector.shape_cast %3 : vector<1x8x256xf32> to vector<8x256xf32>
    %c0_3 = arith.constant 0 : index
    %c0_4 = arith.constant 0 : index
    %c0_5 = arith.constant 0 : index
    %5 = vector.load %arg3[%c0_3, %c0_4, %c0_5] : memref<1x1x256xi32, #tpu.memory_space<vmem>>, vector<1x1x256xi32>
    %6 = vector.shape_cast %5 : vector<1x1x256xi32> to vector<1x256xi32>
    %c256_i32 = arith.constant 256 : i32
    %7 = arith.muli %arg1, %c256_i32 : i32
    %8 = tpu.iota {dimensions = array<i32: 1>} : vector<1x256xi32>
    %9 = vector.broadcast %7 : i32 to vector<1x256xi32>
    %10 = arith.addi %9, %8 : vector<1x256xi32>
    %c256_i32_6 = arith.constant 256 : i32
    %11 = vector.broadcast %c256_i32_6 : i32 to vector<1x256xi32>
    %12 = arith.cmpi slt, %10, %11 : vector<1x256xi32>
    %c255_i32 = arith.constant 255 : i32
    %13 = vector.broadcast %c255_i32 : i32 to vector<1x256xi32>
    %14 = arith.cmpi ne, %6, %13 : vector<1x256xi32>
    %15 = arith.andi %14, %12 : vector<1x256xi1>
    %cst = arith.constant dense<0xFF800000> : vector<256xf32>
    %16 = vector.multi_reduction <maximumf>, %4, %cst [0] : vector<8x256xf32> to vector<256xf32>
    %17 = vector.shape_cast %16 : vector<256xf32> to vector<1x256xf32>
    %18 = vector.broadcast %17 : vector<1x256xf32> to vector<8x256xf32>
    %19 = arith.subf %4, %18 : vector<8x256xf32>
    %20 = math.exp %19 : vector<8x256xf32>
    %cst_7 = arith.constant dense<0.000000e+00> : vector<256xf32>
    %21 = vector.multi_reduction <add>, %20, %cst_7 [0] : vector<8x256xf32> to vector<256xf32>
    %22 = vector.shape_cast %21 : vector<256xf32> to vector<1x256xf32>
    %23 = math.log %22 : vector<1x256xf32>
    %24 = arith.addf %23, %17 : vector<1x256xf32>
    %25 = tpu.iota {dimensions = array<i32: 0>} : vector<8x1xi32>
    %26 = vector.broadcast %6 : vector<1x256xi32> to vector<8x256xi32>
    %27 = vector.broadcast %25 : vector<8x1xi32> to vector<8x256xi32>
    %28 = arith.cmpi eq, %26, %27 : vector<8x256xi32>
    %29 = vector.broadcast %12 : vector<1x256xi1> to vector<8x256xi1>
    %30 = arith.andi %28, %29 : vector<8x256xi1>
    %cst_8 = arith.constant 0.000000e+00 : f32
    %31 = vector.broadcast %cst_8 : f32 to vector<8x256xf32>
    %32 = arith.select %30, %4, %31 : vector<8x256xi1>, vector<8x256xf32>
    %33 = arith.extui %30 : vector<8x256xi1> to vector<8x256xi32>
    %34 = arith.sitofp %33 : vector<8x256xi32> to vector<8x256xf32>
    %cst_9 = arith.constant dense<0.000000e+00> : vector<8xf32>
    %35 = vector.multi_reduction <add>, %34, %cst_9 [1] : vector<8x256xf32> to vector<8xf32>
    %36 = vector.shape_cast %35 : vector<8xf32> to vector<8x1xf32>
    %cst_10 = arith.constant dense<0.000000e+00> : vector<8xf32>
    %37 = vector.multi_reduction <add>, %32, %cst_10 [1] : vector<8x256xf32> to vector<8xf32>
    %38 = vector.shape_cast %37 : vector<8xf32> to vector<8x1xf32>
    %cst_11 = arith.constant 0.000000e+00 : f32
    %39 = vector.broadcast %cst_11 : f32 to vector<1x256xf32>
    %40 = arith.select %15, %24, %39 : vector<1x256xi1>, vector<1x256xf32>
    %cst_12 = arith.constant dense<0.000000e+00> : vector<1xf32>
    %41 = vector.multi_reduction <add>, %40, %cst_12 [1] : vector<1x256xf32> to vector<1xf32>
    %42 = vector.shape_cast %41 : vector<1xf32> to vector<1x1xf32>
    %43 = tpu.iota {dimensions = array<i32: 1>} : vector<8x3xi32>
    %44 = tpu.iota {dimensions = array<i32: 0>} : vector<8x3xi32>
    %c0_i32_13 = arith.constant 0 : i32
    %45 = vector.broadcast %c0_i32_13 : i32 to vector<8x3xi32>
    %46 = arith.cmpi eq, %43, %45 : vector<8x3xi32>
    %cst_14 = arith.constant 0.000000e+00 : f32
    %47 = vector.shape_cast %36 : vector<8x1xf32> to vector<8x1xf32>
    %48 = vector.broadcast %47 : vector<8x1xf32> to vector<8x3xf32>
    %49 = vector.broadcast %cst_14 : f32 to vector<8x3xf32>
    %50 = arith.select %46, %48, %49 : vector<8x3xi1>, vector<8x3xf32>
    %c1_i32 = arith.constant 1 : i32
    %51 = vector.broadcast %c1_i32 : i32 to vector<8x3xi32>
    %52 = arith.cmpi eq, %43, %51 : vector<8x3xi32>
    %cst_15 = arith.constant 0.000000e+00 : f32
    %53 = vector.shape_cast %38 : vector<8x1xf32> to vector<8x1xf32>
    %54 = vector.broadcast %53 : vector<8x1xf32> to vector<8x3xf32>
    %55 = vector.broadcast %cst_15 : f32 to vector<8x3xf32>
    %56 = arith.select %52, %54, %55 : vector<8x3xi1>, vector<8x3xf32>
    %57 = arith.addf %50, %56 : vector<8x3xf32>
    %c2_i32 = arith.constant 2 : i32
    %58 = vector.broadcast %c2_i32 : i32 to vector<8x3xi32>
    %59 = arith.cmpi eq, %43, %58 : vector<8x3xi32>
    %c0_i32_16 = arith.constant 0 : i32
    %60 = vector.broadcast %c0_i32_16 : i32 to vector<8x3xi32>
    %61 = arith.cmpi eq, %44, %60 : vector<8x3xi32>
    %62 = arith.andi %59, %61 : vector<8x3xi1>
    %cst_17 = arith.constant 0.000000e+00 : f32
    %63 = vector.shape_cast %42 : vector<1x1xf32> to vector<1x1xf32>
    %64 = vector.broadcast %63 : vector<1x1xf32> to vector<8x3xf32>
    %65 = vector.broadcast %cst_17 : f32 to vector<8x3xf32>
    %66 = arith.select %62, %64, %65 : vector<8x3xi1>, vector<8x3xf32>
    %67 = arith.addf %57, %66 : vector<8x3xf32>
    %c0_18 = arith.constant 0 : index
    %c0_19 = arith.constant 0 : index
    %c0_20 = arith.constant 0 : index
    %68 = vector.load %arg4[%c0_18, %c0_19, %c0_20] : memref<1x8x3xf32, #tpu.memory_space<vmem>>, vector<1x8x3xf32>
    %69 = vector.shape_cast %67 : vector<8x3xf32> to vector<1x8x3xf32>
    %70 = arith.addf %68, %69 : vector<1x8x3xf32>
    %c0_21 = arith.constant 0 : index
    %c0_22 = arith.constant 0 : index
    %c0_23 = arith.constant 0 : index
    %71 = vector.load %arg4[%c0_21, %c0_22, %c0_23] : memref<1x8x3xf32, #tpu.memory_space<vmem>>, vector<1x8x3xf32>
    tpu.vector_store %arg4[%c0_21, %c0_22, %c0_23], %70 {strides = array<i32>} : memref<1x8x3xf32, #tpu.memory_space<vmem>>, vector<1x8x3xf32>,
    return
  }
  func.func @transform_0(%arg0: i32, %arg1: i32) -> (i32, i32, i32) {
    %c0_i32 = arith.constant 0 : i32
    %c0_i32_0 = arith.constant 0 : i32
    return %arg0, %c0_i32, %arg1 : i32, i32, i32
  }
  func.func @transform_1(%arg0: i32, %arg1: i32) -> (i32, i32, i32) {
    %c0_i32 = arith.constant 0 : i32
    %c0_i32_0 = arith.constant 0 : i32
    return %arg0, %c0_i32, %arg1 : i32, i32, i32
  }
  func.func @transform_2(%arg0: i32, %arg1: i32) -> (i32, i32, i32) {
    %c0_i32 = arith.constant 0 : i32
    %c0_i32_0 = arith.constant 0 : i32
    %c0_i32_1 = arith.constant 0 : i32
    return %arg0, %c0_i32, %c0_i32_0 : i32, i32, i32
  }
}

</mosaic_0001>

<llo_original>
// kernel: ce_dice_loss.1
$region0: #{ce_dice_loss.1}
  #allocation0 [shape = 'u32[]', space=smem, size = 0x4, offset = 0x4, fixed_abs, tag = 'smem constant byte address 0x4 - core index']
  #allocation1 [shape = 'u32[144,128]{1,0:T(1,128)}', space=vmem, size = 0x12000, scoped, tag = 'internal scratch']
  %s0 = inlined_call_operand.vmem [shape: f32[2,8,256], index: 0, kind: input, shape index: {}]
  %s1 = inlined_call_operand.vmem [shape: s32[2,1,256], index: 1, kind: input, shape index: {}]
  %s2 = inlined_call_operand.vmem [shape: f32[2,8,3], index: 2, kind: output, shape index: {}]
  %s3 = sld [smem:[#allocation0]]
  $region45: #{ce_dice_loss.1} parent=0
    _
  %s5 = ssub.s32 1, %s3
  %s6 = scalar_select 0, %s5, %s3
  loop: start=0, step=1, limit=4
  $region2: #{ce_dice_loss.1} parent=0 // loop_pre_header
    _
  $region3: #{ce_dice_loss.1} parent=0 // loop_header
    %s8 = sphi 0, %s12
    %p9 = scmp.ge.s32.totalorder %s8, 4
    %s15 = sphi 0, %s27
    %s16 = sphi 0, %s23
    %s17 = sphi 0, %s15
    %s18 = sphi 0, %s16
    %s19 = sphi 0, %s17
    %s20 = sphi 0, %s18
    %s32 = sphi 0, %s34
    %s35 = sphi 0, %s32
    %s36 = sphi 0, %s35
    %s52 = sphi 0, %s36
    %s60 = sphi 0, %s62
    %s63 = sphi 0, %s60
    %s64 = sphi 0, %s63
    %s80 = sphi 0, %s64
    %s86 = sphi 0, %s88
    %s89 = sphi 0, %s86
    %s90 = sphi 0, %s89
    %s106 = sphi 0, %s90
  $region4: #{ce_dice_loss.1} parent=0 // loop_header_branch
    %11 = sbr.rel (%p9) target = $region8
  $region5: #{ce_dice_loss.1} parent=0 // loop_body
    %s13 = ssub.s32 %s8, 1
    %s14 = ssub.s32 %s8, 2
    %s21 = sadd.s32 1, %s16
    %p22 = scmp.ge.s32.totalorder %s21, 1
    %s23 = scalar_select %p22, 0, %s21
    %s24 = sadd.s32 1, %s15
    %s25 = scalar_select %p22, %s24, %s15
    %p26 = scmp.ge.s32.totalorder %s25, 2
    %s27 = scalar_select %p26, 0, %s25
    %s28 = ssub.s32 %s15, %s27
    %s29 = ssub.s32 %s16, %s23
    %s30 = sor.u32 %s28, %s29
    %p31 = scmp.eq.s32.totalorder %s30, 0
    %s33 = sadd.s32 %s32, 1
    %s34 = scalar_select %p31, %s32, %s33
    %p37 = pneg %p31
    %p38 = scmp.eq.s32.totalorder %s8, 1
    %p39 = por %p37, %p38
    %p40 = scmp.ne.s32.totalorder %s32, %s35
    %p41 = scmp.eq.s32.totalorder %s8, 0
    %p42 = por %p40, %p41
    %p43 = scmp.ne.s32.totalorder %s32, %s35
    %p44 = scmp.eq.s32.totalorder %s13, 1
    %p45 = por %p43, %p44
    %p46 = scmp.ne.s32.totalorder %s35, %s36
    %p47 = scmp.eq.s32.totalorder %s13, 0
    %p48 = por %p46, %p47
    %p49 = scmp.ne.s32.totalorder %s35, %s36
    %p50 = scmp.eq.s32.totalorder %s14, 1
    %p51 = por %p49, %p50
    %p53 = scmp.ne.s32.totalorder %s36, %s52
    %p54 = scmp.eq.s32.totalorder %s14, 0
    %p55 = por %p53, %p54
    %s56 = ssub.s32 %s15, %s27
    %s57 = ssub.s32 %s16, %s23
    %s58 = sor.u32 %s56, %s57
    %p59 = scmp.eq.s32.totalorder %s58, 0
    %s61 = sadd.s32 %s60, 1
    %s62 = scalar_select %p59, %s60, %s61
    %p65 = pneg %p59
    %p66 = scmp.eq.s32.totalorder %s8, 1
    %p67 = por %p65, %p66
    %p68 = scmp.ne.s32.totalorder %s60, %s63
    %p69 = scmp.eq.s32.totalorder %s8, 0
    %p70 = por %p68, %p69
    %p71 = scmp.ne.s32.totalorder %s60, %s63
    %p72 = scmp.eq.s32.totalorder %s13, 1
    %p73 = por %p71, %p72
    %p74 = scmp.ne.s32.totalorder %s63, %s64
    %p75 = scmp.eq.s32.totalorder %s13, 0
    %p76 = por %p74, %p75
    %p77 = scmp.ne.s32.totalorder %s63, %s64
    %p78 = scmp.eq.s32.totalorder %s14, 1
    %p79 = por %p77, %p78
    %p81 = scmp.ne.s32.totalorder %s64, %s80
    %p82 = scmp.eq.s32.totalorder %s14, 0
    %p83 = por %p81, %p82
    %s84 = ssub.s32 %s15, %s27
    %p85 = scmp.eq.s32.totalorder %s84, 0
    %s87 = sadd.s32 %s86, 1
    %s88 = scalar_select %p85, %s86, %s87
    %p91 = pneg %p85
    %p92 = scmp.eq.s32.totalorder %s8, 1
    %p93 = por %p91, %p92
    %p94 = scmp.ne.s32.totalorder %s86, %s89
    %p95 = scmp.eq.s32.totalorder %s8, 0
    %p96 = por %p94, %p95
    %p97 = scmp.ne.s32.totalorder %s86, %s89
    %p98 = scmp.eq.s32.totalorder %s13, 1
    %p99 = por %p97, %p98
    %p100 = scmp.ne.s32.totalorder %s89, %s90
    %p101 = scmp.eq.s32.totalorder %s13, 0
    %p102 = por %p100, %p101
    %p103 = scmp.ne.s32.totalorder %s89, %s90
    %p104 = scmp.eq.s32.totalorder %s14, 1
    %p105 = por %p103, %p104
    %p107 = scmp.ne.s32.totalorder %s90, %s106
    %p108 = scmp.eq.s32.totalorder %s14, 0
    %p109 = por %p107, %p108
    %p110 = scmp.le.s32.totalorder 1, %s8
    %p111 = scmp.lt.s32.totalorder %s8, 3
    %p112 = pnand %p110, %p111
    %p113 = pneg %p112
    // Predicated region
    $region9: #{ce_dice_loss.1} parent=5 // pred_check
      _
    $region10: #{ce_dice_loss.1} parent=5 // pred_check_branch
      %115 = sbr.rel (%p112) target = $region12
    $region11: #{ce_dice_loss.1} parent=5 // pred_region
      %s116 = ssub.s32 %s8, 1
    $region12: #{ce_dice_loss.1} parent=5 // pred_fallthru
      _
    %p117 = scmp.lt.s32.totalorder %s8, 2
    // Predicated region
    $region13: #{ce_dice_loss.1} parent=5 // pred_check
      %p118 = pneg %p117
    $region14: #{ce_dice_loss.1} parent=5 // pred_check_branch
      %120 = sbr.rel (%p118) target = $region16
    $region15: #{ce_dice_loss.1} parent=5 // pred_region
      // Predicated region
      $region17: #{ce_dice_loss.1} parent=15 // pred_check
        %p121 = pneg %p42
      $region18: #{ce_dice_loss.1} parent=15 // pred_check_branch
        %123 = sbr.rel (%p121) target = $region20
      $region19: #{ce_dice_loss.1} parent=15 // pred_region
        %s124 = smul.u32 2, %s16
        %p125 = scmp.lt.s32.totalorder %s15, 1
        %s126 = scalar_select %p125, %s15, 1
        %p127 = scmp.lt.s32.totalorder %s124, 1
        %s128 = scalar_select %p127, %s124, 1
        %s129 = smul.addr %s126, 2
        %s130 = sadd.s32 %s128, %s129
        %s131 = smul.addr %s130, 8
        %s132 = scalar_lea.vmem %s0, %s131
        %s133 = smul.u32 2, %s16
      $region20: #{ce_dice_loss.1} parent=15 // pred_fallthru
        _
      // Predicated region
      $region21: #{ce_dice_loss.1} parent=15 // pred_check
        %p134 = pneg %p70
      $region22: #{ce_dice_loss.1} parent=15 // pred_check_branch
        %136 = sbr.rel (%p134) target = $region24
      $region23: #{ce_dice_loss.1} parent=15 // pred_region
        %s137 = smul.u32 2, %s16
        %p138 = scmp.lt.s32.totalorder %s15, 1
        %s139 = scalar_select %p138, %s15, 1
        %p140 = scmp.lt.s32.totalorder %s137, 1
        %s141 = scalar_select %p140, %s137, 1
        %s142 = smul.addr %s139, 2
        %s143 = sadd.s32 %s141, %s142
        %s144 = scalar_lea.vmem %s1, %s143
        %s145 = smul.u32 2, %s16
      $region24: #{ce_dice_loss.1} parent=15 // pred_fallthru
        _
    $region16: #{ce_dice_loss.1} parent=5 // pred_fallthru
      _
    %p146 = scmp.le.s32.totalorder 1, %s8
    %p147 = scmp.lt.s32.totalorder %s8, 3
    %p148 = pnand %p146, %p147
    %p149 = pneg %p148
    // Predicated region
    $region25: #{ce_dice_loss.1} parent=5 // pred_check
      _
    $region26: #{ce_dice_loss.1} parent=5 // pred_check_branch
      %151 = sbr.rel (%p148) target = $region28
    $region27: #{ce_dice_loss.1} parent=5 // pred_region
      %s152 = ssub.s32 %s8, 1
      %s153 = smul.u32 2, %s18
      %p154 = scmp.lt.s32.totalorder %s17, 1
      %s155 = scalar_select %p154, %s17, 1
      %p156 = scmp.lt.s32.totalorder %s153, 1
      %s157 = scalar_select %p156, %s153, 1
      %s158 = smul.addr %s155, 2
      %s159 = sadd.s32 %s157, %s158
      %s160 = smul.addr %s159, 8
      %s161 = scalar_lea.vmem %s0, %s160
      %p162 = pneg %p48
      %p163 = pneg %p45
      %s164 = smul.u32 2, %s18
      %p165 = scmp.lt.s32.totalorder %s17, 1
      %s166 = scalar_select %p165, %s17, 1
      %p167 = scmp.lt.s32.totalorder %s164, 1
      %s168 = scalar_select %p167, %s164, 1
      %s169 = smul.addr %s166, 2
      %s170 = sadd.s32 %s168, %s169
      %s171 = scalar_lea.vmem %s1, %s170
      %p172 = pneg %p76
      %p173 = pneg %p73
      %p174 = pneg %p102
      %p175 = pneg %p99
      %p176 = scmp.lt.s32.totalorder %s17, 1
      %s177 = scalar_select %p176, %s17, 1
      %s178 = smul.addr %s177, 8
      %s179 = scalar_lea.vmem %s2, %s178
      %s180 = smul.u32 2, %s18
      %p181 = scmp.lt.s32.totalorder %s17, 1
      %s182 = scalar_select %p181, %s17, 1
      %p183 = scmp.lt.s32.totalorder %s180, 1
      %s184 = scalar_select %p183, %s180, 1
      %s185 = smul.addr %s182, 2
      %s186 = sadd.s32 %s184, %s185
      %s187 = smul.addr %s186, 8
      %s188 = scalar_lea.vmem %s0, %s187
      %s189 = smul.u32 2, %s18
      %s190 = smul.u32 2, %s18
      %p191 = scmp.lt.s32.totalorder %s17, 1
      %s192 = scalar_select %p191, %s17, 1
      %p193 = scmp.lt.s32.totalorder %s190, 1
      %s194 = scalar_select %p193, %s190, 1
      %s195 = smul.addr %s192, 2
      %s196 = sadd.s32 %s194, %s195
      %s197 = scalar_lea.vmem %s1, %s196
      %s198 = smul.u32 2, %s18
      %p199 = scmp.lt.s32.totalorder %s17, 1
      %s200 = scalar_select %p199, %s17, 1
      %s201 = smul.addr %s200, 8
      %s202 = scalar_lea.vmem %s2, %s201
      %p203 = scmp.eq.s32.totalorder %s18, 0
      // Predicated region
      $region29: #{ce_dice_loss.1} parent=27 // pred_check
        %p204 = pneg %p203
      $region30: #{ce_dice_loss.1} parent=27 // pred_check_branch
        %206 = sbr.rel (%p204) target = $region32
      $region31: #{ce_dice_loss.1} parent=27 // pred_region
        %vm207 = vcmask 23552
        %208 = vst.msk [vmem:[%s202] sm:$0xff] %vm207, 0.0
      $region32: #{ce_dice_loss.1} parent=27 // pred_fallthru
        _
      %v209 = vld [vmem:[%s188] sm:$0xff]
      %v210 = vld [vmem:[%s188 + $0x8] sm:$0xff]
      %v211 = vld [vmem:[%s197] sm:$0x3]
      %s212 = smul.u32 %s18, 256
      %v213 = vlaneseq
      %v214 = vand.u32 %v213, 127
      %v215 = vadd.s32 %v214, 128
      %v216 = vstv %s212
      %v217 = vadd.s32 %v216, %v214
      %v218 = vadd.s32 %v216, %v215
      %vm219 = vcmp.lt.s32.totalorder %v217, 256
      %vm220 = vcmp.lt.s32.totalorder %v218, 256
      %vm221 = vcmp.ne.s32.totalorder %v211, 255
      %v222 = vsel %vm219, 1, 0
      %v223 = vsel %vm220, 1, 0
      %v224 = vcombine.low %v222, %v223
      %v226 = vunpack.c.l.s4 1966171168
      %v227 = vunpack.c.0.s8 %v226
      %v228 = vlaneseq
      %v229 = vshrl.u32 %v228, 7
      %v230 = vsub.s32 %v227, %v229
      %v231 = vrot.slane %v224, %v230
      %v233 = vunpack.c.l.s4 1966171168
      %v234 = vunpack.c.0.s8 %v233
      %v235 = vlaneseq
      %v236 = vshrl.u32 %v235, 7
      %v237 = vsub.s32 %v234, %v236
      %v238 = vrot.slane %v231, %v237
      %vm239 = vcmp.ne.s32.totalorder %v238, 0
      %vm240 = vmand %vm221, %vm239
      %v241 = vrot.slane %v209, 4
      %v242 = vmax.f32 %v209, %v241
      %v243 = vrot.slane %v242, 2
      %v244 = vmax.f32 %v242, %v243
      %v245 = vrot.slane %v244, 1
      %v246 = vmax.f32 %v244, %v245
      %v247 = vrot.slane %v210, 4
      %v248 = vmax.f32 %v210, %v247
      %v249 = vrot.slane %v248, 2
      %v250 = vmax.f32 %v248, %v249
      %v251 = vrot.slane %v250, 1
      %v252 = vmax.f32 %v250, %v251
      %v253 = vsub.f32 %v209, %v246
      %v254 = vsub.f32 %v210, %v252
      %v255 = vmul.f32 %v253, 1.442695
      %v256 = vpow.pop %v255
      %v257 = vmul.f32 %v254, 1.442695
      %v258 = vpow.pop %v257
      %v259 = vrot.slane %v256, 4
      %v260 = vadd.f32 %v256, %v259
      %v261 = vrot.slane %v260, 2
      %v262 = vadd.f32 %v260, %v261
      %v263 = vrot.slane %v262, 1
      %v264 = vadd.f32 %v262, %v263
      %v265 = vrot.slane %v258, 4
      %v266 = vadd.f32 %v258, %v265
      %v267 = vrot.slane %v266, 2
      %v268 = vadd.f32 %v266, %v267
      %v269 = vrot.slane %v268, 1
      %v270 = vadd.f32 %v268, %v269
      %v271 = vlog2.pop %v264
      %v272 = vmul.f32 %v271, 0.6931472
      %v273 = vlog2.pop %v270
      %v274 = vmul.f32 %v273, 0.6931472
      %v275 = vadd.f32 %v272, %v246
      %v276 = vadd.f32 %v274, %v252
      %v277 = vlaneseq
      %v278 = vshrl.u32 %v277, 7
      %v279 = vlaneseq
      %v280 = vshrl.u32 %v279, 7
      %v281 = vsub.s32 0, %v280
      %v282 = vrot.slane %v211, %v281
      %v283 = vlaneseq
      %v284 = vshrl.u32 %v283, 7
      %v285 = vsub.s32 1, %v284
      %v286 = vrot.slane %v211, %v285
      %vm287 = vcmp.eq.s32.totalorder %v282, %v278
      %vm288 = vcmp.eq.s32.totalorder %v286, %v278
      %vm289 = vcmp.eq.s32.totalorder %v222, 1
      %vm290 = vcmp.eq.s32.totalorder %v223, 1
      %vm291 = vmand %vm287, %vm289
      %vm292 = vmand %vm288, %vm290
      %v293 = vsel %vm291, %v209, 0.0
      %v294 = vsel %vm292, %v210, 0.0
      %v295 = vsel %vm291, 1, 0
      %v296 = vsel %vm292, 1, 0
      %v297 = vcvt.s32.f32 %v295
      %v298 = vcvt.s32.f32 %v296
      %v299 = vadd.f32 %v297, %v298
      %300 = vadd.xlane.f32.xlu0 %v299
      %v301 = vpop.xlane.xlu0 %300
      %v302 = vadd.f32 %v293, %v294
      %303 = vadd.xlane.f32.xlu0 %v302
      %v304 = vpop.xlane.xlu0 %303
      %v307 = vcombine.low %v275, %v276
      %v309 = vunpack.c.l.s4 1966171168
      %v310 = vunpack.c.0.s8 %v309
      %v311 = vlaneseq
      %v312 = vshrl.u32 %v311, 7
      %v313 = vsub.s32 %v310, %v312
      %v314 = vrot.slane %v307, %v313
      %v316 = vunpack.c.l.s4 1966171168
      %v317 = vunpack.c.0.s8 %v316
      %v318 = vlaneseq
      %v319 = vshrl.u32 %v318, 7
      %v320 = vsub.s32 %v317, %v319
      %v321 = vrot.slane %v314, %v320
      %v323 = vsel %vm240, %v321, 0.0
      %v325 = vlaneseq
      %v326 = vshrl.u32 %v325, 7
      %v327 = vsub.s32 0, %v326
      %v328 = vrot.slane %v323, %v327
      %v329 = vlaneseq
      %v330 = vshrl.u32 %v329, 7
      %v331 = vsub.s32 1, %v330
      %v332 = vrot.slane %v323, %v331
      %vm335 = vcmask 1040384
      %v336 = vsel %vm335, %v328, 0.0
      %v337 = vsel %vm335, %v332, 0.0
      %v338 = vadd.f32 %v336, %v337
      %339 = vadd.xlane.f32.xlu0 %v338
      %v340 = vpop.xlane.xlu0 %339
      %vm341 = vcmp.eq.s32.totalorder %v214, 0
      %v342 = vsel %vm341, %v301, 0.0
      %vm343 = vcmp.eq.s32.totalorder %v214, 1
      %v344 = vsel %vm343, %v304, 0.0
      %v345 = vadd.f32 %v342, %v344
      %vm346 = vcmp.eq.s32.totalorder %v214, 2
      %vm347 = vcmp.eq.s32.totalorder %v278, 0
      %vm348 = vmand %vm346, %vm347
      %v349 = vlaneseq
      %v350 = vshrl.u32 %v349, 7
      %v351 = vsub.s32 0, %v350
      %v352 = vrot.slane %v340, %v351
      %v353 = vsel %vm348, %v352, 0.0
      %v354 = vadd.f32 %v345, %v353
      %v355 = vld [vmem:[%s202] sm:$0xff]
      %v356 = vadd.f32 %v355, %v354
      %vm357 = vcmask 23552
      %358 = vst.msk [vmem:[%s202] sm:$0xff] %vm357, %v356
      %p359 = scmp.lt.s32.totalorder %s17, 1
      %s360 = scalar_select %p359, %s17, 1
      %s361 = smul.addr %s360, 8
      %s362 = scalar_lea.vmem %s2, %s361
      // Predicated region
      $region33: #{ce_dice_loss.1} parent=27 // pred_check
        %p363 = pneg %p99
      $region34: #{ce_dice_loss.1} parent=27 // pred_check_branch
        %365 = sbr.rel (%p363) target = $region36
      $region35: #{ce_dice_loss.1} parent=27 // pred_region
        _
      $region36: #{ce_dice_loss.1} parent=27 // pred_fallthru
        _
    $region28: #{ce_dice_loss.1} parent=5 // pred_fallthru
      _
    %p366 = scmp.le.s32.totalorder 2, %s8
    // Predicated region
    $region37: #{ce_dice_loss.1} parent=5 // pred_check
      %p367 = pneg %p366
    $region38: #{ce_dice_loss.1} parent=5 // pred_check_branch
      %369 = sbr.rel (%p367) target = $region40
    $region39: #{ce_dice_loss.1} parent=5 // pred_region
      %s370 = ssub.s32 %s8, 2
      // Predicated region
      $region41: #{ce_dice_loss.1} parent=39 // pred_check
        %p371 = pneg %p105
      $region42: #{ce_dice_loss.1} parent=39 // pred_check_branch
        %373 = sbr.rel (%p371) target = $region44
      $region43: #{ce_dice_loss.1} parent=39 // pred_region
        %p374 = scmp.lt.s32.totalorder %s19, 1
        %s375 = scalar_select %p374, %s19, 1
        %s376 = smul.addr %s375, 8
        %s377 = scalar_lea.vmem %s2, %s376
      $region44: #{ce_dice_loss.1} parent=39 // pred_fallthru
        _
    $region40: #{ce_dice_loss.1} parent=5 // pred_fallthru
      _
  $region6: #{ce_dice_loss.1} parent=0 // loop_footer
    %s12 = sadd.s32 1, %s8
  $region7: #{ce_dice_loss.1} parent=0 // loop_footer_branch
    %7 = sbr.rel target = $region3
  $region8: #{ce_dice_loss.1} parent=0 // loop_exit
    _

</llo_original>
